<compile_context>
chip_gen: v7x
topology: tpu7x:2x2x1
jax: 0.10.0
libtpu: 0.0.40
codegen_flags: <defaults>
</compile_context>

<pallas_src>
import math

import jax
import jax.numpy as jnp
from jax import lax
from jax.experimental import pallas as pl
from jax.experimental.pallas import tpu as pltpu

# ----------------------------- model dims -----------------------------------
B = 2        # batch
S = 8        # sequence length
D = 32       # model size (EncoderLayer.size)
H = 4        # attention heads
DK = D // H
DFF = 64     # feed-forward hidden size
EPS = 1e-6
BS = B * S                # 16 tokens total
HB = H * BS               # 64 head-stacked rows
SCALE = 1.0 / math.sqrt(DK)

# ----------------------------- slab layout (rows of a (232,128) f32 array) ---
R_WQKV = 0            # (D, 3D)   rows   0..31, lanes 0..95
R_W1   = 32           # (D, DFF)  rows  32..63, lanes 0..63
R_W2   = 64           # (DFF, D)  rows  64..127, lanes 0..31
R_WO   = 128          # (D, D)    rows 128..159, lanes 0..31
R_MASK = 160          # (HB, HB)  rows 160..223, lanes 0..63 (additive bias)
R_BQKV = 224          # (1, 3D)
R_B1   = 225          # (1, DFF)
R_B2   = 226          # (1, D)
R_BO   = 227          # (1, D)
SLAB_ROWS = 232       # padded to a multiple of 8


# ----------------------------- Pallas kernel --------------------------------
def _ln_core(v):
    """Torch-style LayerNorm core: (v - mean) / (unbiased std + eps).

    The affine (a, b) parameters are folded into the following matmuls
    host-side, so only the normalization remains in-kernel.
    """
    mean = jnp.mean(v, axis=-1, keepdims=True)
    var = jnp.sum((v - mean) ** 2, axis=-1, keepdims=True) * (1.0 / (D - 1))
    return (v - mean) / (jnp.sqrt(var) + EPS)


def encoder_layer_kernel(x_ref, slab_ref, o_ref):
    x = x_ref[...].astype(jnp.float32)                       # (BS, D)

    # --- unpack the single constant slab (static slices, zero-cost views) ---
    wqkv = slab_ref[R_WQKV:R_WQKV + D, 0:3 * D]              # (D, 3D), LN1 + scale folded
    w1   = slab_ref[R_W1:R_W1 + D, 0:DFF]                    # (D, DFF), LN2 folded
    w2   = slab_ref[R_W2:R_W2 + DFF, 0:D]                    # (DFF, D)
    wo   = slab_ref[R_WO:R_WO + D, 0:D]                      # (D, D)
    bias = slab_ref[R_MASK:R_MASK + HB, 0:HB]                # (HB, HB) additive mask
    bqkv = slab_ref[R_BQKV:R_BQKV + 1, 0:3 * D]              # (1, 3D)
    b1   = slab_ref[R_B1:R_B1 + 1, 0:DFF]                    # (1, DFF)
    b2   = slab_ref[R_B2:R_B2 + 1, 0:D]                      # (1, D)
    bo   = slab_ref[R_BO:R_BO + 1, 0:D]                      # (1, D)

    # ---- sublayer 0: pre-norm multi-head self-attention + residual ----
    z1 = _ln_core(x)
    qkv = jnp.dot(z1, wqkv, preferred_element_type=jnp.float32) + bqkv   # (BS, 3D)

    # head-stacked layout: rows [h*BS:(h+1)*BS] hold head h for all tokens
    q_s = jnp.concatenate([qkv[:, h * DK:(h + 1) * DK] for h in range(H)], axis=0)          # (HB, DK)
    k_s = jnp.concatenate([qkv[:, D + h * DK:D + (h + 1) * DK] for h in range(H)], axis=0)  # (HB, DK)
    v_s = jnp.concatenate([qkv[:, 2 * D + h * DK:2 * D + (h + 1) * DK] for h in range(H)], axis=0)

    # ONE score matmul for all heads & both batches; invalid (cross-head /
    # cross-batch) pairs are knocked out by the precomputed additive bias.
    scores = lax.dot_general(q_s, k_s, (((1,), (1,)), ((), ())),
                             preferred_element_type=jnp.float32)          # (HB, HB)
    scores = scores + bias
    scores = scores - jnp.max(scores, axis=-1, keepdims=True)
    p = jnp.exp(scores)
    p = p * pl.reciprocal(jnp.sum(p, axis=-1, keepdims=True), approx=True)

    head_out = jnp.dot(p, v_s, preferred_element_type=jnp.float32)        # (HB, DK)
    # restack heads back onto the lane dimension: (HB, DK) -> (BS, D)
    attn_in = jnp.concatenate([head_out[h * BS:(h + 1) * BS, :] for h in range(H)], axis=1)
    attn = jnp.dot(attn_in, wo, preferred_element_type=jnp.float32) + bo  # (BS, D)

    x1 = x + attn                                             # residual (dropout = identity)

    # ---- sublayer 1: pre-norm position-wise feed-forward + residual ----
    z2 = _ln_core(x1)
    h1 = jnp.maximum(jnp.dot(z2, w1, preferred_element_type=jnp.float32) + b1, 0.0)
    ff = jnp.dot(h1, w2, preferred_element_type=jnp.float32) + b2

    o_ref[...] = (x1 + ff).astype(o_ref.dtype)


# ----------------------------- param fusion (one-time, constant) -------------
def prepare_fused_params(p):
    """Constant transform of PyTorch-layout params into one (232,128) slab."""
    # fold 1/sqrt(dk) into the Q projection
    wq = p["wq"] * SCALE
    bq = p["bq"] * SCALE
    wqkv0 = jnp.concatenate([wq, p["wk"], p["wv"]], axis=1)               # (D, 3D)
    bqkv0 = jnp.concatenate([bq, p["bk"], p["bv"]], axis=1)               # (1, 3D)

    # fold LayerNorm-1 affine into the QKV projection
    wqkv = p["ln1_a"].reshape(D, 1) * wqkv0
    bqkv = bqkv0 + p["ln1_b"].reshape(1, D) @ wqkv0

    # fold LayerNorm-2 affine into the first FFN linear
    w1 = p["ln2_a"].reshape(D, 1) * p["w1"]
    b1 = p["b1"] + p["ln2_b"].reshape(1, D) @ p["w1"]

    # additive attention-mask bias for the head-stacked (HB, HB) scores:
    # valid iff same head AND same batch.
    r = jnp.arange(HB)
    head_r = r // BS
    batch_r = (r % BS) // S
    valid = (head_r[:, None] == head_r[None, :]) & (batch_r[:, None] == batch_r[None, :])
    mask_bias = jnp.where(valid, 0.0, -1e30).astype(jnp.float32)          # (HB, HB)

    slab = jnp.zeros((SLAB_ROWS, 128), jnp.float32)
    slab = slab.at[R_WQKV:R_WQKV + D, :3 * D].set(wqkv)
    slab = slab.at[R_W1:R_W1 + D, :DFF].set(w1)
    slab = slab.at[R_W2:R_W2 + DFF, :D].set(p["w2"])
    slab = slab.at[R_WO:R_WO + D, :D].set(p["wo"])
    slab = slab.at[R_MASK:R_MASK + HB, :HB].set(mask_bias)
    slab = slab.at[R_BQKV, :3 * D].set(bqkv.reshape(-1))
    slab = slab.at[R_B1, :DFF].set(b1.reshape(-1))
    slab = slab.at[R_B2, :D].set(p["b2"].reshape(-1))
    slab = slab.at[R_BO, :D].set(p["bo"].reshape(-1))
    return slab


# ----------------------------- wrapper ---------------------------------------
def encoder_layer(x, slab):
    """x: (B, S, D) float32 -> (B, S, D) float32."""
    Bx, Sx, Dx = x.shape
    assert (Bx, Sx, Dx) == (B, S, D)
    x2 = x.reshape(Bx * Sx, Dx)      # whole batch as one sublane-dense block

    vmem = pl.BlockSpec(memory_space=pltpu.MemorySpace.VMEM)
    out2 = pl.pallas_call(
        encoder_layer_kernel,
        out_shape=jax.ShapeDtypeStruct((Bx * Sx, Dx), x.dtype),
        in_specs=[vmem, vmem],       # 2 operands: activations + constant slab
        out_specs=vmem,              # no grid: single block, no pipeline
    )(x2, slab)
    return out2.reshape(Bx, Sx, Dx)


# ----------------------------- param init ------------------------------------
def init_params(key):
    ks = jax.random.split(key, 16)

    def lin_w(k, fan_in, fan_out):
        bound = 1.0 / math.sqrt(fan_in)
        return jax.random.uniform(k, (fan_in, fan_out), jnp.float32, -bound, bound)

    def lin_b(k, fan_in, fan_out):
        bound = 1.0 / math.sqrt(fan_in)
        return jax.random.uniform(k, (1, fan_out), jnp.float32, -bound, bound)

    return {
        "wq": lin_w(ks[0], D, D), "bq": lin_b(ks[1], D, D),
        "wk": lin_w(ks[2], D, D), "bk": lin_b(ks[3], D, D),
        "wv": lin_w(ks[4], D, D), "bv": lin_b(ks[5], D, D),
        "wo": lin_w(ks[6], D, D), "bo": lin_b(ks[7], D, D),
        "ln1_a": 1.0 + 0.1 * jax.random.normal(ks[8], (1, D), jnp.float32),
        "ln1_b": 0.1 * jax.random.normal(ks[9], (1, D), jnp.float32),
        "ln2_a": 1.0 + 0.1 * jax.random.normal(ks[10], (1, D), jnp.float32),
        "ln2_b": 0.1 * jax.random.normal(ks[11], (1, D), jnp.float32),
        "w1": lin_w(ks[12], D, DFF), "b1": lin_b(ks[13], D, DFF),
        "w2": lin_w(ks[14], DFF, D), "b2": lin_b(ks[15], DFF, D),
    }


# ----------------------------- reference (pure JAX, unfused params) -----------
def encoder_layer_ref(x, p):
    def ln(v, a, b):
        mean = jnp.mean(v, axis=-1, keepdims=True)
        var = jnp.sum((v - mean) ** 2, axis=-1, keepdims=True) / (v.shape[-1] - 1)
        return a * (v - mean) / (jnp.sqrt(var) + EPS) + b

    n1 = ln(x, p["ln1_a"], p["ln1_b"])
    q = n1 @ p["wq"] + p["bq"]
    k = n1 @ p["wk"] + p["bk"]
    v = n1 @ p["wv"] + p["bv"]
    q = q.reshape(B, S, H, DK).transpose(0, 2, 1, 3)
    k = k.reshape(B, S, H, DK).transpose(0, 2, 1, 3)
    v = v.reshape(B, S, H, DK).transpose(0, 2, 1, 3)
    sc = jnp.einsum("bhqd,bhkd->bhqk", q, k) / math.sqrt(DK)
    psm = jax.nn.softmax(sc, axis=-1)
    at = jnp.einsum("bhqk,bhkd->bhqd", psm, v).transpose(0, 2, 1, 3).reshape(B, S, D)
    x1 = x + (at @ p["wo"] + p["bo"])
    n2 = ln(x1, p["ln2_a"], p["ln2_b"])
    ff = jnp.maximum(n2 @ p["w1"] + p["b1"], 0.0) @ p["w2"] + p["b2"]
    return x1 + ff


# ----------------------------- main -------------------------------------------
if __name__ == "__main__":
    key = jax.random.PRNGKey(0)
    kx, kp = jax.random.split(key)
    x = jax.random.normal(kx, (B, S, D), jnp.float32)
    params = init_params(kp)
    slab = prepare_fused_params(params)

    out = jax.block_until_ready(encoder_layer(x, slab))

    ref = encoder_layer_ref(x, params)
    # tolerance 1e-3: pl.reciprocal(approx=True) on the softmax denominator and
    # the (mathematically exact) LN-affine / 1/sqrt(dk) constant folds change
    # rounding order slightly; everything else is exact f32.
    assert jnp.allclose(out, ref, atol=1e-3, rtol=1e-3), "mismatch vs JAX reference"

    print("KERNEL_OK")
</pallas_src>

<mosaic_0001>
module attributes {stable_mosaic.version = 11 : i64} {
  func.func @encoder_layer_kernel(%arg0: memref<16x32xf32, #tpu.memory_space<vmem>>, %arg1: memref<232x128xf32, #tpu.memory_space<vmem>>, %arg2: memref<16x32xf32, #tpu.memory_space<vmem>>) attributes {dimension_semantics = [], scalar_prefetch = 0 : i64, scratch_operands = 0 : i64, tpu.core_type = #tpu.core_type<tc>} {
    %c0 = arith.constant 0 : index
    %c0_0 = arith.constant 0 : index
    %0 = vector.load %arg0[%c0, %c0_0] : memref<16x32xf32, #tpu.memory_space<vmem>>, vector<16x32xf32>
    %c0_1 = arith.constant 0 : index
    %c0_2 = arith.constant 0 : index
    %1 = vector.load %arg1[%c0_1, %c0_2] : memref<232x128xf32, #tpu.memory_space<vmem>>, vector<32x96xf32>
    %c32 = arith.constant 32 : index
    %c0_3 = arith.constant 0 : index
    %2 = vector.load %arg1[%c32, %c0_3] : memref<232x128xf32, #tpu.memory_space<vmem>>, vector<32x64xf32>
    %c64 = arith.constant 64 : index
    %c0_4 = arith.constant 0 : index
    %3 = vector.load %arg1[%c64, %c0_4] : memref<232x128xf32, #tpu.memory_space<vmem>>, vector<64x32xf32>
    %c128 = arith.constant 128 : index
    %c0_5 = arith.constant 0 : index
    %4 = vector.load %arg1[%c128, %c0_5] : memref<232x128xf32, #tpu.memory_space<vmem>>, vector<32x32xf32>
    %c160 = arith.constant 160 : index
    %c0_6 = arith.constant 0 : index
    %5 = vector.load %arg1[%c160, %c0_6] : memref<232x128xf32, #tpu.memory_space<vmem>>, vector<64x64xf32>
    %c224 = arith.constant 224 : index
    %c0_7 = arith.constant 0 : index
    %6 = vector.load %arg1[%c224, %c0_7] : memref<232x128xf32, #tpu.memory_space<vmem>>, vector<1x96xf32>
    %c225 = arith.constant 225 : index
    %c0_8 = arith.constant 0 : index
    %7 = vector.load %arg1[%c225, %c0_8] : memref<232x128xf32, #tpu.memory_space<vmem>>, vector<1x64xf32>
    %c226 = arith.constant 226 : index
    %c0_9 = arith.constant 0 : index
    %8 = vector.load %arg1[%c226, %c0_9] : memref<232x128xf32, #tpu.memory_space<vmem>>, vector<1x32xf32>
    %c227 = arith.constant 227 : index
    %c0_10 = arith.constant 0 : index
    %9 = vector.load %arg1[%c227, %c0_10] : memref<232x128xf32, #tpu.memory_space<vmem>>, vector<1x32xf32>
    %cst = arith.constant dense<0.000000e+00> : vector<16xf32>
    %10 = vector.multi_reduction <add>, %0, %cst [1] : vector<16x32xf32> to vector<16xf32>
    %11 = vector.shape_cast %10 : vector<16xf32> to vector<16x1xf32>
    %cst_11 = arith.constant 3.200000e+01 : f32
    %12 = vector.broadcast %cst_11 : f32 to vector<16x1xf32>
    %13 = arith.divf %11, %12 : vector<16x1xf32>
    %14 = vector.broadcast %13 : vector<16x1xf32> to vector<16x32xf32>
    %15 = arith.subf %0, %14 : vector<16x32xf32>
    %16 = arith.mulf %15, %15 : vector<16x32xf32>
    %cst_12 = arith.constant dense<0.000000e+00> : vector<16xf32>
    %17 = vector.multi_reduction <add>, %16, %cst_12 [1] : vector<16x32xf32> to vector<16xf32>
    %18 = vector.shape_cast %17 : vector<16xf32> to vector<16x1xf32>
    %cst_13 = arith.constant 0.0322580636 : f32
    %19 = vector.broadcast %cst_13 : f32 to vector<16x1xf32>
    %20 = arith.mulf %18, %19 : vector<16x1xf32>
    %21 = vector.broadcast %13 : vector<16x1xf32> to vector<16x32xf32>
    %22 = arith.subf %0, %21 : vector<16x32xf32>
    %23 = math.sqrt %20 : vector<16x1xf32>
    %cst_14 = arith.constant 9.99999997E-7 : f32
    %24 = vector.broadcast %cst_14 : f32 to vector<16x1xf32>
    %25 = arith.addf %23, %24 : vector<16x1xf32>
    %26 = vector.broadcast %25 : vector<16x1xf32> to vector<16x32xf32>
    %27 = arith.divf %22, %26 : vector<16x32xf32>
    %cst_15 = arith.constant dense<0.000000e+00> : vector<16x96xf32>
    %28 = tpu.matmul %27, %1, %cst_15 {dimension_numbers = #tpu.dot_dimension_numbers<[1], [0], [0], [1], [0, 0, 1, 1], [], []>} : vector<16x32xf32>, vector<32x96xf32>, vector<16x96xf32> -> vector<16x96xf32>
    %29 = vector.broadcast %6 : vector<1x96xf32> to vector<16x96xf32>
    %30 = arith.addf %28, %29 : vector<16x96xf32>
    %31 = vector.extract_strided_slice %30 {offsets = [0, 0], sizes = [16, 8], strides = [1, 1]} : vector<16x96xf32> to vector<16x8xf32>
    %32 = vector.extract_strided_slice %30 {offsets = [0, 8], sizes = [16, 8], strides = [1, 1]} : vector<16x96xf32> to vector<16x8xf32>
    %33 = vector.extract_strided_slice %30 {offsets = [0, 16], sizes = [16, 8], strides = [1, 1]} : vector<16x96xf32> to vector<16x8xf32>
    %34 = vector.extract_strided_slice %30 {offsets = [0, 24], sizes = [16, 8], strides = [1, 1]} : vector<16x96xf32> to vector<16x8xf32>
    %35 = tpu.concatenate %31, %32, %33, %34 in 0 : vector<16x8xf32>, vector<16x8xf32>, vector<16x8xf32>, vector<16x8xf32> -> vector<64x8xf32>
    %36 = vector.extract_strided_slice %30 {offsets = [0, 32], sizes = [16, 8], strides = [1, 1]} : vector<16x96xf32> to vector<16x8xf32>
    %37 = vector.extract_strided_slice %30 {offsets = [0, 40], sizes = [16, 8], strides = [1, 1]} : vector<16x96xf32> to vector<16x8xf32>
    %38 = vector.extract_strided_slice %30 {offsets = [0, 48], sizes = [16, 8], strides = [1, 1]} : vector<16x96xf32> to vector<16x8xf32>
    %39 = vector.extract_strided_slice %30 {offsets = [0, 56], sizes = [16, 8], strides = [1, 1]} : vector<16x96xf32> to vector<16x8xf32>
    %40 = tpu.concatenate %36, %37, %38, %39 in 0 : vector<16x8xf32>, vector<16x8xf32>, vector<16x8xf32>, vector<16x8xf32> -> vector<64x8xf32>
    %41 = vector.extract_strided_slice %30 {offsets = [0, 64], sizes = [16, 8], strides = [1, 1]} : vector<16x96xf32> to vector<16x8xf32>
    %42 = vector.extract_strided_slice %30 {offsets = [0, 72], sizes = [16, 8], strides = [1, 1]} : vector<16x96xf32> to vector<16x8xf32>
    %43 = vector.extract_strided_slice %30 {offsets = [0, 80], sizes = [16, 8], strides = [1, 1]} : vector<16x96xf32> to vector<16x8xf32>
    %44 = vector.extract_strided_slice %30 {offsets = [0, 88], sizes = [16, 8], strides = [1, 1]} : vector<16x96xf32> to vector<16x8xf32>
    %45 = tpu.concatenate %41, %42, %43, %44 in 0 : vector<16x8xf32>, vector<16x8xf32>, vector<16x8xf32>, vector<16x8xf32> -> vector<64x8xf32>
    %cst_16 = arith.constant dense<0.000000e+00> : vector<64x64xf32>
    %46 = tpu.matmul %35, %40, %cst_16 {dimension_numbers = #tpu.dot_dimension_numbers<[1], [1], [0], [0], [0, 0, 1, 0], [], []>} : vector<64x8xf32>, vector<64x8xf32>, vector<64x64xf32> -> vector<64x64xf32>
    %47 = arith.addf %46, %5 : vector<64x64xf32>
    %cst_17 = arith.constant dense<0xFF800000> : vector<64xf32>
    %48 = vector.multi_reduction <maximumf>, %47, %cst_17 [1] : vector<64x64xf32> to vector<64xf32>
    %49 = vector.shape_cast %48 : vector<64xf32> to vector<64x1xf32>
    %50 = vector.broadcast %49 : vector<64x1xf32> to vector<64x64xf32>
    %51 = arith.subf %47, %50 : vector<64x64xf32>
    %52 = math.exp %51 : vector<64x64xf32>
    %cst_18 = arith.constant dense<0.000000e+00> : vector<64xf32>
    %53 = vector.multi_reduction <add>, %52, %cst_18 [1] : vector<64x64xf32> to vector<64xf32>
    %54 = vector.shape_cast %53 : vector<64xf32> to vector<64x1xf32>
    %55 = tpu.reciprocal %54 {approx = true} : vector<64x1xf32> -> vector<64x1xf32>
    %56 = vector.broadcast %55 : vector<64x1xf32> to vector<64x64xf32>
    %57 = arith.mulf %52, %56 : vector<64x64xf32>
    %cst_19 = arith.constant dense<0.000000e+00> : vector<64x8xf32>
    %58 = tpu.matmul %57, %45, %cst_19 {dimension_numbers = #tpu.dot_dimension_numbers<[1], [0], [0], [1], [0, 0, 1, 1], [], []>} : vector<64x64xf32>, vector<64x8xf32>, vector<64x8xf32> -> vector<64x8xf32>
    %59 = vector.extract_strided_slice %58 {offsets = [0, 0], sizes = [16, 8], strides = [1, 1]} : vector<64x8xf32> to vector<16x8xf32>
    %60 = vector.extract_strided_slice %58 {offsets = [16, 0], sizes = [16, 8], strides = [1, 1]} : vector<64x8xf32> to vector<16x8xf32>
    %61 = vector.extract_strided_slice %58 {offsets = [32, 0], sizes = [16, 8], strides = [1, 1]} : vector<64x8xf32> to vector<16x8xf32>
    %62 = vector.extract_strided_slice %58 {offsets = [48, 0], sizes = [16, 8], strides = [1, 1]} : vector<64x8xf32> to vector<16x8xf32>
    %63 = tpu.concatenate %59, %60, %61, %62 in 1 : vector<16x8xf32>, vector<16x8xf32>, vector<16x8xf32>, vector<16x8xf32> -> vector<16x32xf32>
    %cst_20 = arith.constant dense<0.000000e+00> : vector<16x32xf32>
    %64 = tpu.matmul %63, %4, %cst_20 {dimension_numbers = #tpu.dot_dimension_numbers<[1], [0], [0], [1], [0, 0, 1, 1], [], []>} : vector<16x32xf32>, vector<32x32xf32>, vector<16x32xf32> -> vector<16x32xf32>
    %65 = vector.broadcast %9 : vector<1x32xf32> to vector<16x32xf32>
    %66 = arith.addf %64, %65 : vector<16x32xf32>
    %67 = arith.addf %0, %66 : vector<16x32xf32>
    %cst_21 = arith.constant dense<0.000000e+00> : vector<16xf32>
    %68 = vector.multi_reduction <add>, %67, %cst_21 [1] : vector<16x32xf32> to vector<16xf32>
    %69 = vector.shape_cast %68 : vector<16xf32> to vector<16x1xf32>
    %cst_22 = arith.constant 3.200000e+01 : f32
    %70 = vector.broadcast %cst_22 : f32 to vector<16x1xf32>
    %71 = arith.divf %69, %70 : vector<16x1xf32>
    %72 = vector.broadcast %71 : vector<16x1xf32> to vector<16x32xf32>
    %73 = arith.subf %67, %72 : vector<16x32xf32>
    %74 = arith.mulf %73, %73 : vector<16x32xf32>
    %cst_23 = arith.constant dense<0.000000e+00> : vector<16xf32>
    %75 = vector.multi_reduction <add>, %74, %cst_23 [1] : vector<16x32xf32> to vector<16xf32>
    %76 = vector.shape_cast %75 : vector<16xf32> to vector<16x1xf32>
    %cst_24 = arith.constant 0.0322580636 : f32
    %77 = vector.broadcast %cst_24 : f32 to vector<16x1xf32>
    %78 = arith.mulf %76, %77 : vector<16x1xf32>
    %79 = vector.broadcast %71 : vector<16x1xf32> to vector<16x32xf32>
    %80 = arith.subf %67, %79 : vector<16x32xf32>
    %81 = math.sqrt %78 : vector<16x1xf32>
    %cst_25 = arith.constant 9.99999997E-7 : f32
    %82 = vector.broadcast %cst_25 : f32 to vector<16x1xf32>
    %83 = arith.addf %81, %82 : vector<16x1xf32>
    %84 = vector.broadcast %83 : vector<16x1xf32> to vector<16x32xf32>
    %85 = arith.divf %80, %84 : vector<16x32xf32>
    %cst_26 = arith.constant dense<0.000000e+00> : vector<16x64xf32>
    %86 = tpu.matmul %85, %2, %cst_26 {dimension_numbers = #tpu.dot_dimension_numbers<[1], [0], [0], [1], [0, 0, 1, 1], [], []>} : vector<16x32xf32>, vector<32x64xf32>, vector<16x64xf32> -> vector<16x64xf32>
    %87 = vector.broadcast %7 : vector<1x64xf32> to vector<16x64xf32>
    %88 = arith.addf %86, %87 : vector<16x64xf32>
    %cst_27 = arith.constant 0.000000e+00 : f32
    %89 = vector.broadcast %cst_27 : f32 to vector<16x64xf32>
    %90 = arith.maximumf %88, %89 : vector<16x64xf32>
    %cst_28 = arith.constant dense<0.000000e+00> : vector<16x32xf32>
    %91 = tpu.matmul %90, %3, %cst_28 {dimension_numbers = #tpu.dot_dimension_numbers<[1], [0], [0], [1], [0, 0, 1, 1], [], []>} : vector<16x64xf32>, vector<64x32xf32>, vector<16x32xf32> -> vector<16x32xf32>
    %92 = vector.broadcast %8 : vector<1x32xf32> to vector<16x32xf32>
    %93 = arith.addf %91, %92 : vector<16x32xf32>
    %94 = arith.addf %67, %93 : vector<16x32xf32>
    %c0_29 = arith.constant 0 : index
    %c0_30 = arith.constant 0 : index
    %95 = vector.load %arg2[%c0_29, %c0_30] : memref<16x32xf32, #tpu.memory_space<vmem>>, vector<16x32xf32>
    tpu.vector_store %arg2[%c0_29, %c0_30], %94 {strides = array<i32>} : memref<16x32xf32, #tpu.memory_space<vmem>>, vector<16x32xf32>,
    return
  }
}

</mosaic_0001>

<llo_original>
// kernel: tpu_custom_call.1
$region0: #{tpu_custom_call.1}
  #allocation0 [shape = 'u32[]', space=smem, size = 0x4, offset = 0x4, fixed_abs, tag = 'smem constant byte address 0x4 - core index']
  #allocation1 [shape = 'u32[144,128]{1,0:T(1,128)}', space=vmem, size = 0x12000, scoped, tag = 'internal scratch']
  %s0 = inlined_call_operand.hbm [shape: f32[16,32], index: 0, kind: input, shape index: {}]
  %s1 = inlined_call_operand.hbm [shape: f32[232,128], index: 1, kind: input, shape index: {}]
  %s2 = inlined_call_operand.hbm [shape: f32[16,32], index: 2, kind: output, shape index: {}]
  %s3 = sld [smem:[#allocation0]]
  $region26: #{tpu_custom_call.1} parent=0
    _
  %s5 = ssub.s32 1, %s3
  %s6 = scalar_select 0, %s5, %s3
  $region1: #{tpu_custom_call.1} parent=0
    #allocation2 [shape = 'u8[8192]{0}', space=vmem, size = 0x2000, scoped, tag = 'input window, operand 0, single buffered']
    #allocation3 [shape = 's32[1]{0}', space=sflag, size = 0x4, scoped, tag = 'scoped memory for tpu_custom_call.1']
    #allocation4 [shape = 's32[1]{0}', space=sflag, size = 0x4, scoped, tag = 'scoped memory for tpu_custom_call.1']
    #allocation5 [shape = 'u8[118784]{0}', space=vmem, size = 0x1d000, scoped, tag = 'input window, operand 1, single buffered']
    #allocation6 [shape = 's32[1]{0}', space=sflag, size = 0x4, scoped, tag = 'scoped memory for tpu_custom_call.1']
    #allocation7 [shape = 'u8[8192]{0}', space=vmem, size = 0x2000, scoped, tag = 'output window, operand 0, single buffered']
    %7 = vsyncpa [#allocation3], 0
    %8 = vsyncpa [#allocation6], 0
    %9 = vsyncpa [#allocation4], 0
    // Predicated region
    $region2: #{tpu_custom_call.1} parent=1 // pred_check
      _
    $region3: #{tpu_custom_call.1} parent=1 // pred_check_branch
      %11 = sbr.rel (0) target = $region5
    $region4: #{tpu_custom_call.1} parent=1 // pred_region
      %s13 = ssub.s32 256, 256
      %14 = vsyncadd [#allocation3], %s13
      %s15 = sshll.u32 [#allocation2], 4
      %s16 = int_to_ptr.vmem [resolvable:$true] %s15
      %21 = dma.hbm_to_vmem [thread:$0]  %s0, 256, %s16, [#allocation3], 128, 128, 8
    $region5: #{tpu_custom_call.1} parent=1 // pred_fallthru
      _
    // Predicated region
    $region6: #{tpu_custom_call.1} parent=1 // pred_check
      _
    $region7: #{tpu_custom_call.1} parent=1 // pred_check_branch
      %23 = sbr.rel (0) target = $region9
    $region8: #{tpu_custom_call.1} parent=1 // pred_region
      %s25 = ssub.s32 3712, 3712
      %26 = vsyncadd [#allocation6], %s25
      %s27 = sshll.u32 [#allocation5], 4
      %s28 = int_to_ptr.vmem [resolvable:$true] %s27
      %33 = dma.hbm_to_vmem [thread:$0]  %s1, 3712, %s28, [#allocation6], 128, 128, 8
    $region9: #{tpu_custom_call.1} parent=1 // pred_fallthru
      _
    // Predicated region
    $region10: #{tpu_custom_call.1} parent=1 // pred_check
      _
    $region11: #{tpu_custom_call.1} parent=1 // pred_check_branch
      %35 = sbr.rel (0) target = $region13
    $region12: #{tpu_custom_call.1} parent=1 // pred_region
      %36 = dma.done [#allocation3], 256
    $region13: #{tpu_custom_call.1} parent=1 // pred_fallthru
      _
    // Predicated region
    $region14: #{tpu_custom_call.1} parent=1 // pred_check
      _
    $region15: #{tpu_custom_call.1} parent=1 // pred_check_branch
      %38 = sbr.rel (0) target = $region17
    $region16: #{tpu_custom_call.1} parent=1 // pred_region
      %39 = dma.done [#allocation6], 3712
    $region17: #{tpu_custom_call.1} parent=1 // pred_fallthru
      _
    %v40 = vld [vmem:[#allocation2] sm:$0xff]
    %v41 = vld [vmem:[#allocation2 + $0x8] sm:$0xff]
    %v42 = vld [vmem:[#allocation5] sm:$0xff]
    %v43 = vld [vmem:[#allocation5 + $0x8] sm:$0xff]
    %v44 = vld [vmem:[#allocation5 + $0x10] sm:$0xff]
    %v45 = vld [vmem:[#allocation5 + $0x18] sm:$0xff]
    %v46 = vld [vmem:[#allocation5 + $0x20] sm:$0xff]
    %v47 = vld [vmem:[#allocation5 + $0x28] sm:$0xff]
    %v48 = vld [vmem:[#allocation5 + $0x30] sm:$0xff]
    %v49 = vld [vmem:[#allocation5 + $0x38] sm:$0xff]
    %v50 = vld [vmem:[#allocation5 + $0x40] sm:$0xff]
    %v51 = vld [vmem:[#allocation5 + $0x48] sm:$0xff]
    %v52 = vld [vmem:[#allocation5 + $0x50] sm:$0xff]
    %v53 = vld [vmem:[#allocation5 + $0x58] sm:$0xff]
    %v54 = vld [vmem:[#allocation5 + $0x60] sm:$0xff]
    %v55 = vld [vmem:[#allocation5 + $0x68] sm:$0xff]
    %v56 = vld [vmem:[#allocation5 + $0x70] sm:$0xff]
    %v57 = vld [vmem:[#allocation5 + $0x78] sm:$0xff]
    %v58 = vld [vmem:[#allocation5 + $0x80] sm:$0xff]
    %v59 = vld [vmem:[#allocation5 + $0x88] sm:$0xff]
    %v60 = vld [vmem:[#allocation5 + $0x90] sm:$0xff]
    %v61 = vld [vmem:[#allocation5 + $0x98] sm:$0xff]
    %v62 = vld [vmem:[#allocation5 + $0xa0] sm:$0xff]
    %v63 = vld [vmem:[#allocation5 + $0xa8] sm:$0xff]
    %v64 = vld [vmem:[#allocation5 + $0xb0] sm:$0xff]
    %v65 = vld [vmem:[#allocation5 + $0xb8] sm:$0xff]
    %v66 = vld [vmem:[#allocation5 + $0xc0] sm:$0xff]
    %v67 = vld [vmem:[#allocation5 + $0xc8] sm:$0xff]
    %v68 = vld [vmem:[#allocation5 + $0xd0] sm:$0xff]
    %v69 = vld [vmem:[#allocation5 + $0xd8] sm:$0xff]
    %v70 = vld [vmem:[#allocation5 + $0xe0] sm:$0x1]
    %v71 = vld [vmem:[#allocation5 + $0xe1] sm:$0x1]
    %v72 = vld [vmem:[#allocation5 + $0xe2] sm:$0x1]
    %v73 = vld [vmem:[#allocation5 + $0xe3] sm:$0x1]
    %vm74 = vcmask 261120
    %v75 = vsel %vm74, %v40, 0.0
    %76 = vadd.xlane.f32.xlu0 %v75
    %v77 = vpop.xlane.xlu0 %76
    %v78 = vsel %vm74, %v41, 0.0
    %79 = vadd.xlane.f32.xlu0 %v78
    %v80 = vpop.xlane.xlu0 %79
    %v81 = vrcp.pop 32.0
    %v82 = vmul.f32 %v77, %v81
    %v83 = vmul.f32 %v80, %v81
    %v84 = vsub.f32 %v40, %v82
    %v85 = vsub.f32 %v41, %v83
    %v86 = vmul.f32 %v84, %v84
    %v87 = vmul.f32 %v85, %v85
    %v88 = vsel %vm74, %v86, 0.0
    %89 = vadd.xlane.f32.xlu0 %v88
    %v90 = vpop.xlane.xlu0 %89
    %v91 = vsel %vm74, %v87, 0.0
    %92 = vadd.xlane.f32.xlu0 %v91
    %v93 = vpop.xlane.xlu0 %92
    %v94 = vmul.f32 %v90, 0.032258064
    %v95 = vmul.f32 %v93, 0.032258064
    %v96 = vrsqrt.pop %v94
    %v97 = vmul.f32 %v94, %v96
    %vm98 = vcmp.eq.f32.partialorder %v94, inf
    %v99 = vsel %vm98, %v94, %v97
    %vm100 = vcmp.eq.f32.partialorder %v94, 0.0
    %v101 = vand.u32 %v94, 2147483648
    %v102 = vsel %vm100, %v101, %v99
    %v103 = vrsqrt.pop %v95
    %v104 = vmul.f32 %v95, %v103
    %vm105 = vcmp.eq.f32.partialorder %v95, inf
    %v106 = vsel %vm105, %v95, %v104
    %vm107 = vcmp.eq.f32.partialorder %v95, 0.0
    %v108 = vand.u32 %v95, 2147483648
    %v109 = vsel %vm107, %v108, %v106
    %v110 = vadd.f32 %v102, 1e-06
    %v111 = vadd.f32 %v109, 1e-06
    %v112 = vrcp.pop %v110
    %v113 = vmul.f32 %v84, %v112
    %v114 = vrcp.pop %v111
    %v115 = vmul.f32 %v85, %v114
    %v116 = vlaneseq
    %v117 = vshrl.u32 %v116, 7
    %v118 = vsub.s32 0, %v117
    %v119 = vrot.slane %v70, %v118
    %v121 = vsel %vm74, %v113, 0
    %v124 = vsel %vm74, %v115, 0
    %126 = vmatprep.subr.mxu0 0.0
    %127 = vmatpush1.msra.mxu0 %v42
    %128 = vmatprep.subr.mxu0 0.0
    %129 = vmatpush1.msra.mxu0 %v43
    %130 = vmatprep.subr.mxu0 0.0
    %131 = vmatpush1.msra.mxu0 %v44
    %132 = vmatprep.subr.mxu0 0.0
    %133 = vmatpush1.msra.mxu0 %v45
    %134 = vmatprep.subr.mxu0 0.0
    %135 = vmatpush1.msra.mxu0 0.0
    %136 = vmatprep.subr.mxu0 0.0
    %137 = vmatpush1.msra.mxu0 0.0
    %138 = vmatprep.subr.mxu0 0.0
    %139 = vmatpush1.msra.mxu0 0.0
    %140 = vmatprep.subr.mxu0 0.0
    %141 = vmatpush1.msra.mxu0 0.0
    %142 = vmatprep.subr.mxu0 0.0
    %143 = vmatpush1.msra.mxu0 0.0
    %144 = vmatprep.subr.mxu0 0.0
    %145 = vmatpush1.msra.mxu0 0.0
    %146 = vmatprep.subr.mxu0 0.0
    %147 = vmatpush1.msra.mxu0 0.0
    %148 = vmatprep.subr.mxu0 0.0
    %149 = vmatpush1.msra.mxu0 0.0
    %150 = vmatprep.subr.mxu0 0.0
    %151 = vmatpush1.msra.mxu0 0.0
    %152 = vmatprep.subr.mxu0 0.0
    %153 = vmatpush1.msra.mxu0 0.0
    %154 = vmatprep.subr.mxu0 0.0
    %155 = vmatpush1.msra.mxu0 0.0
    %156 = vmatprep.subr.mxu0 0.0
    %157 = vmatpush1.msra.mxu0 0.0
    %158 = vmatprep.subr.mxu0 0.0
    %159 = vmatpush1.msra.mxu0 0.0
    %160 = vmatprep.subr.mxu0 0.0
    %161 = vmatpush1.msra.mxu0 0.0
    %162 = vmatprep.subr.mxu0 0.0
    %163 = vmatpush1.msra.mxu0 0.0
    %164 = vmatprep.subr.mxu0 0.0
    %165 = vmatpush1.msra.mxu0 0.0
    %166 = vmatprep.subr.mxu0 0.0
    %167 = vmatpush1.msra.mxu0 0.0
    %168 = vmatprep.subr.mxu0 0.0
    %169 = vmatpush1.msra.mxu0 0.0
    %170 = vmatprep.subr.mxu0 0.0
    %171 = vmatpush1.msra.mxu0 0.0
    %172 = vmatprep.subr.mxu0 0.0
    %173 = vmatpush1.msra.mxu0 0.0
    %174 = vmatprep.subr.mxu0 0.0
    %175 = vmatpush1.msra.mxu0 0.0
    %176 = vmatprep.subr.mxu0 0.0
    %177 = vmatpush1.msra.mxu0 0.0
    %178 = vmatprep.subr.mxu0 0.0
    %179 = vmatpush1.msra.mxu0 0.0
    %180 = vmatprep.subr.mxu0 0.0
    %181 = vmatpush1.msra.mxu0 0.0
    %182 = vmatprep.subr.mxu0 0.0
    %183 = vmatpush1.msra.mxu0 0.0
    %184 = vmatprep.subr.mxu0 0.0
    %185 = vmatpush1.msra.mxu0 0.0
    %186 = vmatprep.subr.mxu0 0.0
    %187 = vmatpush1.msra.mxu0 0.0
    %188 = vmatprep.subr.mxu0 0.0
    %189 = vmatpush1.msra.mxu0 0.0
    %190 = vmatprep.mubr.f32.mxu0 0.0
    %191 = vmatmul.mubr.f32.gmra.mrb[0].mxu0 %v121
    %v192 = vpop.f32.mrb[0].mxu0
    %v193 = vadd.f32 %v119, %v192
    %v194 = vpop.f32.mrb[0].mxu0
    %195 = vmatprep.mubr.f32.mxu0 0.0
    %196 = vmatmul.mubr.f32.gmra.mrb[0].mxu0 %v124
    %v197 = vpop.f32.mrb[0].mxu0
    %v198 = vadd.f32 %v119, %v197
    %v199 = vpop.f32.mrb[0].mxu0
    %200 = vdwg.mxu0
    %203 = vrot.lane.b32.xlu0 %v193, 120
    %v204 = vpop.permute.xlu0 %203
    %205 = vrot.lane.b32.xlu0 %v198, 120
    %v206 = vpop.permute.xlu0 %205
    %207 = vrot.lane.b32.xlu0 %v193, 112
    %v208 = vpop.permute.xlu0 %207
    %209 = vrot.lane.b32.xlu0 %v198, 112
    %v210 = vpop.permute.xlu0 %209
    %211 = vrot.lane.b32.xlu0 %v193, 104
    %v212 = vpop.permute.xlu0 %211
    %213 = vrot.lane.b32.xlu0 %v198, 104
    %v214 = vpop.permute.xlu0 %213
    %215 = vrot.lane.b32.xlu0 %v193, 96
    %v216 = vpop.permute.xlu0 %215
    %217 = vrot.lane.b32.xlu0 %v198, 96
    %v218 = vpop.permute.xlu0 %217
    %219 = vrot.lane.b32.xlu0 %v204, 96
    %v220 = vpop.permute.xlu0 %219
    %221 = vrot.lane.b32.xlu0 %v206, 96
    %v222 = vpop.permute.xlu0 %221
    %223 = vrot.lane.b32.xlu0 %v208, 96
    %v224 = vpop.permute.xlu0 %223
    %225 = vrot.lane.b32.xlu0 %v210, 96
    %v226 = vpop.permute.xlu0 %225
    %227 = vrot.lane.b32.xlu0 %v212, 96
    %v228 = vpop.permute.xlu0 %227
    %229 = vrot.lane.b32.xlu0 %v214, 96
    %v230 = vpop.permute.xlu0 %229
    %vm231 = vcmask 64512
    %v232 = vsel %vm231, %v193, 0
    %v234 = vsel %vm231, %v198, 0
    %v236 = vsel %vm231, %v204, 0
    %v238 = vsel %vm231, %v206, 0
    %v240 = vsel %vm231, %v208, 0
    %v242 = vsel %vm231, %v210, 0
    %v244 = vsel %vm231, %v212, 0
    %v246 = vsel %vm231, %v214, 0
    %v248 = vsel %vm231, %v216, 0
    %v250 = vsel %vm231, %v218, 0
    %v252 = vsel %vm231, %v220, 0
    %v254 = vsel %vm231, %v222, 0
    %v256 = vsel %vm231, %v224, 0
    %v258 = vsel %vm231, %v226, 0
    %v260 = vsel %vm231, %v228, 0
    %v262 = vsel %vm231, %v230, 0
    %264 = vmatprep.subr.mxu0 0.0
    %265 = vmatpush1.xpose.msra.mxu0 %v248
    %266 = vmatprep.subr.mxu0 0.0
    %267 = vmatpush1.xpose.msra.mxu0 %v250
    %268 = vmatprep.subr.mxu0 0.0
    %269 = vmatpush1.xpose.msra.mxu0 %v252
    %270 = vmatprep.subr.mxu0 0.0
    %271 = vmatpush1.xpose.msra.mxu0 %v254
    %272 = vmatprep.subr.mxu0 0.0
    %273 = vmatpush1.xpose.msra.mxu0 %v256
    %274 = vmatprep.subr.mxu0 0.0
    %275 = vmatpush1.xpose.msra.mxu0 %v258
    %276 = vmatprep.subr.mxu0 0.0
    %277 = vmatpush1.xpose.msra.mxu0 %v260
    %278 = vmatprep.subr.mxu0 0.0
    %279 = vmatpush1.xpose.msra.mxu0 %v262
    %280 = vmatprep.subr.mxu0 0.0
    %281 = vmatpush1.xpose.msra.mxu0 0.0
    %282 = vmatprep.subr.mxu0 0.0
    %283 = vmatpush1.xpose.msra.mxu0 0.0
    %284 = vmatprep.subr.mxu0 0.0
    %285 = vmatpush1.xpose.msra.mxu0 0.0
    %286 = vmatprep.subr.mxu0 0.0
    %287 = vmatpush1.xpose.msra.mxu0 0.0
    %288 = vmatprep.subr.mxu0 0.0
    %289 = vmatpush1.xpose.msra.mxu0 0.0
    %290 = vmatprep.subr.mxu0 0.0
    %291 = vmatpush1.xpose.msra.mxu0 0.0
    %292 = vmatprep.subr.mxu0 0.0
    %293 = vmatpush1.xpose.msra.mxu0 0.0
    %294 = vmatprep.subr.mxu0 0.0
    %295 = vmatpush1.xpose.msra.mxu0 0.0
    %296 = vmatprep.subr.mxu0 0.0
    %297 = vmatpush1.xpose.msra.mxu0 0.0
    %298 = vmatprep.subr.mxu0 0.0
    %299 = vmatpush1.xpose.msra.mxu0 0.0
    %300 = vmatprep.subr.mxu0 0.0
    %301 = vmatpush1.xpose.msra.mxu0 0.0
    %302 = vmatprep.subr.mxu0 0.0
    %303 = vmatpush1.xpose.msra.mxu0 0.0
    %304 = vmatprep.subr.mxu0 0.0
    %305 = vmatpush1.xpose.msra.mxu0 0.0
    %306 = vmatprep.subr.mxu0 0.0
    %307 = vmatpush1.xpose.msra.mxu0 0.0
    %308 = vmatprep.subr.mxu0 0.0
    %309 = vmatpush1.xpose.msra.mxu0 0.0
    %310 = vmatprep.subr.mxu0 0.0
    %311 = vmatpush1.xpose.msra.mxu0 0.0
    %312 = vmatprep.subr.mxu0 0.0
    %313 = vmatpush1.xpose.msra.mxu0 0.0
    %314 = vmatprep.subr.mxu0 0.0
    %315 = vmatpush1.xpose.msra.mxu0 0.0
    %316 = vmatprep.subr.mxu0 0.0
    %317 = vmatpush1.xpose.msra.mxu0 0.0
    %318 = vmatprep.subr.mxu0 0.0
    %319 = vmatpush1.xpose.msra.mxu0 0.0
    %320 = vmatprep.subr.mxu0 0.0
    %321 = vmatpush1.xpose.msra.mxu0 0.0
    %322 = vmatprep.subr.mxu0 0.0
    %323 = vmatpush1.xpose.msra.mxu0 0.0
    %324 = vmatprep.subr.mxu0 0.0
    %325 = vmatpush1.xpose.msra.mxu0 0.0
    %326 = vmatprep.subr.mxu0 0.0
    %327 = vmatpush1.xpose.msra.mxu0 0.0
    %328 = vmatprep.mubr.f32.mxu0 0.0
    %329 = vmatmul.mubr.f32.gmra.mrb[0].mxu0 %v232
    %v330 = vpop.f32.mrb[0].mxu0
    %v331 = vadd.f32 %v62, %v330
    %v332 = vpop.f32.mrb[0].mxu0
    %333 = vmatprep.mubr.f32.mxu0 0.0
    %334 = vmatmul.mubr.f32.gmra.mrb[0].mxu0 %v234
    %v335 = vpop.f32.mrb[0].mxu0
    %v336 = vadd.f32 %v63, %v335
    %v337 = vpop.f32.mrb[0].mxu0
    %338 = vmatprep.mubr.f32.mxu0 0.0
    %339 = vmatmul.mubr.f32.gmra.mrb[0].mxu0 %v236
    %v340 = vpop.f32.mrb[0].mxu0
    %v341 = vadd.f32 %v64, %v340
    %v342 = vpop.f32.mrb[0].mxu0
    %343 = vmatprep.mubr.f32.mxu0 0.0
    %344 = vmatmul.mubr.f32.gmra.mrb[0].mxu0 %v238
    %v345 = vpop.f32.mrb[0].mxu0
    %v346 = vadd.f32 %v65, %v345
    %v347 = vpop.f32.mrb[0].mxu0
    %348 = vmatprep.mubr.f32.mxu0 0.0
    %349 = vmatmul.mubr.f32.gmra.mrb[0].mxu0 %v240
    %v350 = vpop.f32.mrb[0].mxu0
    %v351 = vadd.f32 %v66, %v350
    %v352 = vpop.f32.mrb[0].mxu0
    %353 = vmatprep.mubr.f32.mxu0 0.0
    %354 = vmatmul.mubr.f32.gmra.mrb[0].mxu0 %v242
    %v355 = vpop.f32.mrb[0].mxu0
    %v356 = vadd.f32 %v67, %v355
    %v357 = vpop.f32.mrb[0].mxu0
    %358 = vmatprep.mubr.f32.mxu0 0.0
    %359 = vmatmul.mubr.f32.gmra.mrb[0].mxu0 %v244
    %v360 = vpop.f32.mrb[0].mxu0
    %v361 = vadd.f32 %v68, %v360
    %v362 = vpop.f32.mrb[0].mxu0
    %363 = vmatprep.mubr.f32.mxu0 0.0
    %364 = vmatmul.mubr.f32.gmra.mrb[0].mxu0 %v246
    %v365 = vpop.f32.mrb[0].mxu0
    %v366 = vadd.f32 %v69, %v365
    %v367 = vpop.f32.mrb[0].mxu0
    %368 = vdwg.mxu0
    %vm369 = vcmask 523264
    %v370 = vsel %vm369, %v331, -inf
    %371 = vmax.xlane.f32.xlu0 %v370
    %v372 = vpop.xlane.xlu0 %371
    %v373 = vsel %vm369, %v336, -inf
    %374 = vmax.xlane.f32.xlu0 %v373
    %v375 = vpop.xlane.xlu0 %374
    %v376 = vsel %vm369, %v341, -inf
    %377 = vmax.xlane.f32.xlu0 %v376
    %v378 = vpop.xlane.xlu0 %377
    %v379 = vsel %vm369, %v346, -inf
    %380 = vmax.xlane.f32.xlu0 %v379
    %v381 = vpop.xlane.xlu0 %380
    %v382 = vsel %vm369, %v351, -inf
    %383 = vmax.xlane.f32.xlu0 %v382
    %v384 = vpop.xlane.xlu0 %383
    %v385 = vsel %vm369, %v356, -inf
    %386 = vmax.xlane.f32.xlu0 %v385
    %v387 = vpop.xlane.xlu0 %386
    %v388 = vsel %vm369, %v361, -inf
    %389 = vmax.xlane.f32.xlu0 %v388
    %v390 = vpop.xlane.xlu0 %389
    %v391 = vsel %vm369, %v366, -inf
    %392 = vmax.xlane.f32.xlu0 %v391
    %v393 = vpop.xlane.xlu0 %392
    %v394 = vsub.f32 %v331, %v372
    %v395 = vsub.f32 %v336, %v375
    %v396 = vsub.f32 %v341, %v378
    %v397 = vsub.f32 %v346, %v381
    %v398 = vsub.f32 %v351, %v384
    %v399 = vsub.f32 %v356, %v387
    %v400 = vsub.f32 %v361, %v390
    %v401 = vsub.f32 %v366, %v393
    %v402 = vmul.f32 %v394, 1.442695
    %v403 = vpow.pop %v402
    %v404 = vmul.f32 %v395, 1.442695
    %v405 = vpow.pop %v404
    %v406 = vmul.f32 %v396, 1.442695
    %v407 = vpow.pop %v406
    %v408 = vmul.f32 %v397, 1.442695
    %v409 = vpow.pop %v408
    %v410 = vmul.f32 %v398, 1.442695
    %v411 = vpow.pop %v410
    %v412 = vmul.f32 %v399, 1.442695
    %v413 = vpow.pop %v412
    %v414 = vmul.f32 %v400, 1.442695
    %v415 = vpow.pop %v414
    %v416 = vmul.f32 %v401, 1.442695
    %v417 = vpow.pop %v416
    %v418 = vsel %vm369, %v403, 0.0
    %419 = vadd.xlane.f32.xlu0 %v418
    %v420 = vpop.xlane.xlu0 %419
    %v421 = vsel %vm369, %v405, 0.0
    %422 = vadd.xlane.f32.xlu0 %v421
    %v423 = vpop.xlane.xlu0 %422
    %v424 = vsel %vm369, %v407, 0.0
    %425 = vadd.xlane.f32.xlu0 %v424
    %v426 = vpop.xlane.xlu0 %425
    %v427 = vsel %vm369, %v409, 0.0
    %428 = vadd.xlane.f32.xlu0 %v427
    %v429 = vpop.xlane.xlu0 %428
    %v430 = vsel %vm369, %v411, 0.0
    %431 = vadd.xlane.f32.xlu0 %v430
    %v432 = vpop.xlane.xlu0 %431
    %v433 = vsel %vm369, %v413, 0.0
    %434 = vadd.xlane.f32.xlu0 %v433
    %v435 = vpop.xlane.xlu0 %434
    %v436 = vsel %vm369, %v415, 0.0
    %437 = vadd.xlane.f32.xlu0 %v436
    %v438 = vpop.xlane.xlu0 %437
    %v439 = vsel %vm369, %v417, 0.0
    %440 = vadd.xlane.f32.xlu0 %v439
    %v441 = vpop.xlane.xlu0 %440
    %v442 = vrcp.pop %v420
    %v443 = vrcp.pop %v423
    %v444 = vrcp.pop %v426
    %v445 = vrcp.pop %v429
    %v446 = vrcp.pop %v432
    %v447 = vrcp.pop %v435
    %v448 = vrcp.pop %v438
    %v449 = vrcp.pop %v441
    %v450 = vmul.f32 %v403, %v442
    %v451 = vmul.f32 %v405, %v443
    %v452 = vmul.f32 %v407, %v444
    %v453 = vmul.f32 %v409, %v445
    %v454 = vmul.f32 %v411, %v446
    %v455 = vmul.f32 %v413, %v447
    %v456 = vmul.f32 %v415, %v448
    %v457 = vmul.f32 %v417, %v449
    %458 = vrot.lane.b32.xlu0 %v193, 64
    %v459 = vpop.permute.xlu0 %458
    %460 = vrot.lane.b32.xlu0 %v198, 64
    %v461 = vpop.permute.xlu0 %460
    %462 = vrot.lane.b32.xlu0 %v204, 64
    %v463 = vpop.permute.xlu0 %462
    %464 = vrot.lane.b32.xlu0 %v206, 64
    %v465 = vpop.permute.xlu0 %464
    %466 = vrot.lane.b32.xlu0 %v208, 64
    %v467 = vpop.permute.xlu0 %466
    %468 = vrot.lane.b32.xlu0 %v210, 64
    %v469 = vpop.permute.xlu0 %468
    %470 = vrot.lane.b32.xlu0 %v212, 64
    %v471 = vpop.permute.xlu0 %470
    %472 = vrot.lane.b32.xlu0 %v214, 64
    %v473 = vpop.permute.xlu0 %472
    %v483 = vsel %vm369, %v450, 0
    %v486 = vsel %vm369, %v451, 0
    %v489 = vsel %vm369, %v452, 0
    %v492 = vsel %vm369, %v453, 0
    %v495 = vsel %vm369, %v454, 0
    %v498 = vsel %vm369, %v455, 0
    %v501 = vsel %vm369, %v456, 0
    %v504 = vsel %vm369, %v457, 0
    %506 = vmatprep.subr.mxu0 0.0
    %507 = vmatpush1.msra.mxu0 %v459
    %508 = vmatprep.subr.mxu0 0.0
    %509 = vmatpush1.msra.mxu0 %v461
    %510 = vmatprep.subr.mxu0 0.0
    %511 = vmatpush1.msra.mxu0 %v463
    %512 = vmatprep.subr.mxu0 0.0
    %513 = vmatpush1.msra.mxu0 %v465
    %514 = vmatprep.subr.mxu0 0.0
    %515 = vmatpush1.msra.mxu0 %v467
    %516 = vmatprep.subr.mxu0 0.0
    %517 = vmatpush1.msra.mxu0 %v469
    %518 = vmatprep.subr.mxu0 0.0
    %519 = vmatpush1.msra.mxu0 %v471
    %520 = vmatprep.subr.mxu0 0.0
    %521 = vmatpush1.msra.mxu0 %v473
    %522 = vmatprep.subr.mxu0 0.0
    %523 = vmatpush1.msra.mxu0 0.0
    %524 = vmatprep.subr.mxu0 0.0
    %525 = vmatpush1.msra.mxu0 0.0
    %526 = vmatprep.subr.mxu0 0.0
    %527 = vmatpush1.msra.mxu0 0.0
    %528 = vmatprep.subr.mxu0 0.0
    %529 = vmatpush1.msra.mxu0 0.0
    %530 = vmatprep.subr.mxu0 0.0
    %531 = vmatpush1.msra.mxu0 0.0
    %532 = vmatprep.subr.mxu0 0.0
    %533 = vmatpush1.msra.mxu0 0.0
    %534 = vmatprep.subr.mxu0 0.0
    %535 = vmatpush1.msra.mxu0 0.0
    %536 = vmatprep.subr.mxu0 0.0
    %537 = vmatpush1.msra.mxu0 0.0
    %538 = vmatprep.subr.mxu0 0.0
    %539 = vmatpush1.msra.mxu0 0.0
    %540 = vmatprep.subr.mxu0 0.0
    %541 = vmatpush1.msra.mxu0 0.0
    %542 = vmatprep.subr.mxu0 0.0
    %543 = vmatpush1.msra.mxu0 0.0
    %544 = vmatprep.subr.mxu0 0.0
    %545 = vmatpush1.msra.mxu0 0.0
    %546 = vmatprep.subr.mxu0 0.0
    %547 = vmatpush1.msra.mxu0 0.0
    %548 = vmatprep.subr.mxu0 0.0
    %549 = vmatpush1.msra.mxu0 0.0
    %550 = vmatprep.subr.mxu0 0.0
    %551 = vmatpush1.msra.mxu0 0.0
    %552 = vmatprep.subr.mxu0 0.0
    %553 = vmatpush1.msra.mxu0 0.0
    %554 = vmatprep.subr.mxu0 0.0
    %555 = vmatpush1.msra.mxu0 0.0
    %556 = vmatprep.subr.mxu0 0.0
    %557 = vmatpush1.msra.mxu0 0.0
    %558 = vmatprep.subr.mxu0 0.0
    %559 = vmatpush1.msra.mxu0 0.0
    %560 = vmatprep.subr.mxu0 0.0
    %561 = vmatpush1.msra.mxu0 0.0
    %562 = vmatprep.subr.mxu0 0.0
    %563 = vmatpush1.msra.mxu0 0.0
    %564 = vmatprep.subr.mxu0 0.0
    %565 = vmatpush1.msra.mxu0 0.0
    %566 = vmatprep.subr.mxu0 0.0
    %567 = vmatpush1.msra.mxu0 0.0
    %568 = vmatprep.subr.mxu0 0.0
    %569 = vmatpush1.msra.mxu0 0.0
    %570 = vmatprep.mubr.f32.mxu0 0.0
    %571 = vmatmul.mubr.f32.gmra.mrb[0].mxu0 %v483
    %v572 = vpop.f32.mrb[0].mxu0
    %v573 = vadd.f32 0.0, %v572
    %v574 = vpop.f32.mrb[0].mxu0
    %575 = vmatprep.mubr.f32.mxu0 0.0
    %576 = vmatmul.mubr.f32.gmra.mrb[0].mxu0 %v486
    %v577 = vpop.f32.mrb[0].mxu0
    %v578 = vadd.f32 0.0, %v577
    %v579 = vpop.f32.mrb[0].mxu0
    %580 = vmatprep.mubr.f32.mxu0 0.0
    %581 = vmatmul.mubr.f32.gmra.mrb[0].mxu0 %v489
    %v582 = vpop.f32.mrb[0].mxu0
    %v583 = vadd.f32 0.0, %v582
    %v584 = vpop.f32.mrb[0].mxu0
    %585 = vmatprep.mubr.f32.mxu0 0.0
    %586 = vmatmul.mubr.f32.gmra.mrb[0].mxu0 %v492
    %v587 = vpop.f32.mrb[0].mxu0
    %v588 = vadd.f32 0.0, %v587
    %v589 = vpop.f32.mrb[0].mxu0
    %590 = vmatprep.mubr.f32.mxu0 0.0
    %591 = vmatmul.mubr.f32.gmra.mrb[0].mxu0 %v495
    %v592 = vpop.f32.mrb[0].mxu0
    %v593 = vadd.f32 0.0, %v592
    %v594 = vpop.f32.mrb[0].mxu0
    %595 = vmatprep.mubr.f32.mxu0 0.0
    %596 = vmatmul.mubr.f32.gmra.mrb[0].mxu0 %v498
    %v597 = vpop.f32.mrb[0].mxu0
    %v598 = vadd.f32 0.0, %v597
    %v599 = vpop.f32.mrb[0].mxu0
    %600 = vmatprep.mubr.f32.mxu0 0.0
    %601 = vmatmul.mubr.f32.gmra.mrb[0].mxu0 %v501
    %v602 = vpop.f32.mrb[0].mxu0
    %v603 = vadd.f32 0.0, %v602
    %v604 = vpop.f32.mrb[0].mxu0
    %605 = vmatprep.mubr.f32.mxu0 0.0
    %606 = vmatmul.mubr.f32.gmra.mrb[0].mxu0 %v504
    %v607 = vpop.f32.mrb[0].mxu0
    %v608 = vadd.f32 0.0, %v607
    %v609 = vpop.f32.mrb[0].mxu0
    %610 = vdwg.mxu0
    %613 = vrot.lane.b32.xlu0 %v583, 8
    %v614 = vpop.permute.xlu0 %613
    %615 = vrot.lane.b32.xlu0 %v588, 8
    %v616 = vpop.permute.xlu0 %615
    %621 = vrot.lane.b32.xlu0 %v593, 16
    %v622 = vpop.permute.xlu0 %621
    %623 = vrot.lane.b32.xlu0 %v598, 16
    %v624 = vpop.permute.xlu0 %623
    %629 = vrot.lane.b32.xlu0 %v603, 24
    %v630 = vpop.permute.xlu0 %629
    %631 = vrot.lane.b32.xlu0 %v608, 24
    %v632 = vpop.permute.xlu0 %631
    %v635 = vsel %vm231, %v573, %v614
    %v636 = vsel %vm231, %v578, %v616
    %vm637 = vcmask 130048
    %v638 = vsel %vm637, %v635, %v622
    %v639 = vsel %vm637, %v636, %v624
    %vm640 = vcmask 195584
    %v641 = vsel %vm640, %v638, %v630
    %v642 = vsel %vm640, %v639, %v632
    %v643 = vlaneseq
    %v644 = vshrl.u32 %v643, 7
    %v645 = vsub.s32 0, %v644
    %v646 = vrot.slane %v73, %v645
    %v648 = vsel %vm74, %v641, 0
    %v651 = vsel %vm74, %v642, 0
    %653 = vmatprep.subr.mxu0 0.0
    %654 = vmatpush1.msra.mxu0 %v58
    %655 = vmatprep.subr.mxu0 0.0
    %656 = vmatpush1.msra.mxu0 %v59
    %657 = vmatprep.subr.mxu0 0.0
    %658 = vmatpush1.msra.mxu0 %v60
    %659 = vmatprep.subr.mxu0 0.0
    %660 = vmatpush1.msra.mxu0 %v61
    %661 = vmatprep.subr.mxu0 0.0
    %662 = vmatpush1.msra.mxu0 0.0
    %663 = vmatprep.subr.mxu0 0.0
    %664 = vmatpush1.msra.mxu0 0.0
    %665 = vmatprep.subr.mxu0 0.0
    %666 = vmatpush1.msra.mxu0 0.0
    %667 = vmatprep.subr.mxu0 0.0
    %668 = vmatpush1.msra.mxu0 0.0
    %669 = vmatprep.subr.mxu0 0.0
    %670 = vmatpush1.msra.mxu0 0.0
    %671 = vmatprep.subr.mxu0 0.0
    %672 = vmatpush1.msra.mxu0 0.0
    %673 = vmatprep.subr.mxu0 0.0
    %674 = vmatpush1.msra.mxu0 0.0
    %675 = vmatprep.subr.mxu0 0.0
    %676 = vmatpush1.msra.mxu0 0.0
    %677 = vmatprep.subr.mxu0 0.0
    %678 = vmatpush1.msra.mxu0 0.0
    %679 = vmatprep.subr.mxu0 0.0
    %680 = vmatpush1.msra.mxu0 0.0
    %681 = vmatprep.subr.mxu0 0.0
    %682 = vmatpush1.msra.mxu0 0.0
    %683 = vmatprep.subr.mxu0 0.0
    %684 = vmatpush1.msra.mxu0 0.0
    %685 = vmatprep.subr.mxu0 0.0
    %686 = vmatpush1.msra.mxu0 0.0
    %687 = vmatprep.subr.mxu0 0.0
    %688 = vmatpush1.msra.mxu0 0.0
    %689 = vmatprep.subr.mxu0 0.0
    %690 = vmatpush1.msra.mxu0 0.0
    %691 = vmatprep.subr.mxu0 0.0
    %692 = vmatpush1.msra.mxu0 0.0
    %693 = vmatprep.subr.mxu0 0.0
    %694 = vmatpush1.msra.mxu0 0.0
    %695 = vmatprep.subr.mxu0 0.0
    %696 = vmatpush1.msra.mxu0 0.0
    %697 = vmatprep.subr.mxu0 0.0
    %698 = vmatpush1.msra.mxu0 0.0
    %699 = vmatprep.subr.mxu0 0.0
    %700 = vmatpush1.msra.mxu0 0.0
    %701 = vmatprep.subr.mxu0 0.0
    %702 = vmatpush1.msra.mxu0 0.0
    %703 = vmatprep.subr.mxu0 0.0
    %704 = vmatpush1.msra.mxu0 0.0
    %705 = vmatprep.subr.mxu0 0.0
    %706 = vmatpush1.msra.mxu0 0.0
    %707 = vmatprep.subr.mxu0 0.0
    %708 = vmatpush1.msra.mxu0 0.0
    %709 = vmatprep.subr.mxu0 0.0
    %710 = vmatpush1.msra.mxu0 0.0
    %711 = vmatprep.subr.mxu0 0.0
    %712 = vmatpush1.msra.mxu0 0.0
    %713 = vmatprep.subr.mxu0 0.0
    %714 = vmatpush1.msra.mxu0 0.0
    %715 = vmatprep.subr.mxu0 0.0
    %716 = vmatpush1.msra.mxu0 0.0
    %717 = vmatprep.mubr.f32.mxu0 0.0
    %718 = vmatmul.mubr.f32.gmra.mrb[0].mxu0 %v648
    %v719 = vpop.f32.mrb[0].mxu0
    %v720 = vadd.f32 %v646, %v719
    %v721 = vpop.f32.mrb[0].mxu0
    %722 = vmatprep.mubr.f32.mxu0 0.0
    %723 = vmatmul.mubr.f32.gmra.mrb[0].mxu0 %v651
    %v724 = vpop.f32.mrb[0].mxu0
    %v725 = vadd.f32 %v646, %v724
    %v726 = vpop.f32.mrb[0].mxu0
    %727 = vdwg.mxu0
    %v728 = vadd.f32 %v40, %v720
    %v729 = vadd.f32 %v41, %v725
    %v730 = vsel %vm74, %v728, 0.0
    %731 = vadd.xlane.f32.xlu0 %v730
    %v732 = vpop.xlane.xlu0 %731
    %v733 = vsel %vm74, %v729, 0.0
    %734 = vadd.xlane.f32.xlu0 %v733
    %v735 = vpop.xlane.xlu0 %734
    %v736 = vmul.f32 %v732, %v81
    %v737 = vmul.f32 %v735, %v81
    %v738 = vsub.f32 %v728, %v736
    %v739 = vsub.f32 %v729, %v737
    %v740 = vmul.f32 %v738, %v738
    %v741 = vmul.f32 %v739, %v739
    %v742 = vsel %vm74, %v740, 0.0
    %743 = vadd.xlane.f32.xlu0 %v742
    %v744 = vpop.xlane.xlu0 %743
    %v745 = vsel %vm74, %v741, 0.0
    %746 = vadd.xlane.f32.xlu0 %v745
    %v747 = vpop.xlane.xlu0 %746
    %v748 = vmul.f32 %v744, 0.032258064
    %v749 = vmul.f32 %v747, 0.032258064
    %v750 = vrsqrt.pop %v748
    %v751 = vmul.f32 %v748, %v750
    %vm752 = vcmp.eq.f32.partialorder %v748, inf
    %v753 = vsel %vm752, %v748, %v751
    %vm754 = vcmp.eq.f32.partialorder %v748, 0.0
    %v755 = vand.u32 %v748, 2147483648
    %v756 = vsel %vm754, %v755, %v753
    %v757 = vrsqrt.pop %v749
    %v758 = vmul.f32 %v749, %v757
    %vm759 = vcmp.eq.f32.partialorder %v749, inf
    %v760 = vsel %vm759, %v749, %v758
    %vm761 = vcmp.eq.f32.partialorder %v749, 0.0
    %v762 = vand.u32 %v749, 2147483648
    %v763 = vsel %vm761, %v762, %v760
    %v764 = vadd.f32 %v756, 1e-06
    %v765 = vadd.f32 %v763, 1e-06
    %v766 = vrcp.pop %v764
    %v767 = vmul.f32 %v738, %v766
    %v768 = vrcp.pop %v765
    %v769 = vmul.f32 %v739, %v768
    %v770 = vlaneseq
    %v771 = vshrl.u32 %v770, 7
    %v772 = vsub.s32 0, %v771
    %v773 = vrot.slane %v71, %v772
    %v775 = vsel %vm74, %v767, 0
    %v778 = vsel %vm74, %v769, 0
    %780 = vmatprep.subr.mxu0 0.0
    %781 = vmatpush1.msra.mxu0 %v46
    %782 = vmatprep.subr.mxu0 0.0
    %783 = vmatpush1.msra.mxu0 %v47
    %784 = vmatprep.subr.mxu0 0.0
    %785 = vmatpush1.msra.mxu0 %v48
    %786 = vmatprep.subr.mxu0 0.0
    %787 = vmatpush1.msra.mxu0 %v49
    %788 = vmatprep.subr.mxu0 0.0
    %789 = vmatpush1.msra.mxu0 0.0
    %790 = vmatprep.subr.mxu0 0.0
    %791 = vmatpush1.msra.mxu0 0.0
    %792 = vmatprep.subr.mxu0 0.0
    %793 = vmatpush1.msra.mxu0 0.0
    %794 = vmatprep.subr.mxu0 0.0
    %795 = vmatpush1.msra.mxu0 0.0
    %796 = vmatprep.subr.mxu0 0.0
    %797 = vmatpush1.msra.mxu0 0.0
    %798 = vmatprep.subr.mxu0 0.0
    %799 = vmatpush1.msra.mxu0 0.0
    %800 = vmatprep.subr.mxu0 0.0
    %801 = vmatpush1.msra.mxu0 0.0
    %802 = vmatprep.subr.mxu0 0.0
    %803 = vmatpush1.msra.mxu0 0.0
    %804 = vmatprep.subr.mxu0 0.0
    %805 = vmatpush1.msra.mxu0 0.0
    %806 = vmatprep.subr.mxu0 0.0
    %807 = vmatpush1.msra.mxu0 0.0
    %808 = vmatprep.subr.mxu0 0.0
    %809 = vmatpush1.msra.mxu0 0.0
    %810 = vmatprep.subr.mxu0 0.0
    %811 = vmatpush1.msra.mxu0 0.0
    %812 = vmatprep.subr.mxu0 0.0
    %813 = vmatpush1.msra.mxu0 0.0
    %814 = vmatprep.subr.mxu0 0.0
    %815 = vmatpush1.msra.mxu0 0.0
    %816 = vmatprep.subr.mxu0 0.0
    %817 = vmatpush1.msra.mxu0 0.0
    %818 = vmatprep.subr.mxu0 0.0
    %819 = vmatpush1.msra.mxu0 0.0
    %820 = vmatprep.subr.mxu0 0.0
    %821 = vmatpush1.msra.mxu0 0.0
    %822 = vmatprep.subr.mxu0 0.0
    %823 = vmatpush1.msra.mxu0 0.0
    %824 = vmatprep.subr.mxu0 0.0
    %825 = vmatpush1.msra.mxu0 0.0
    %826 = vmatprep.subr.mxu0 0.0
    %827 = vmatpush1.msra.mxu0 0.0
    %828 = vmatprep.subr.mxu0 0.0
    %829 = vmatpush1.msra.mxu0 0.0
    %830 = vmatprep.subr.mxu0 0.0
    %831 = vmatpush1.msra.mxu0 0.0
    %832 = vmatprep.subr.mxu0 0.0
    %833 = vmatpush1.msra.mxu0 0.0
    %834 = vmatprep.subr.mxu0 0.0
    %835 = vmatpush1.msra.mxu0 0.0
    %836 = vmatprep.subr.mxu0 0.0
    %837 = vmatpush1.msra.mxu0 0.0
    %838 = vmatprep.subr.mxu0 0.0
    %839 = vmatpush1.msra.mxu0 0.0
    %840 = vmatprep.subr.mxu0 0.0
    %841 = vmatpush1.msra.mxu0 0.0
    %842 = vmatprep.subr.mxu0 0.0
    %843 = vmatpush1.msra.mxu0 0.0
    %844 = vmatprep.mubr.f32.mxu0 0.0
    %845 = vmatmul.mubr.f32.gmra.mrb[0].mxu0 %v775
    %v846 = vpop.f32.mrb[0].mxu0
    %v847 = vadd.f32 %v773, %v846
    %v848 = vpop.f32.mrb[0].mxu0
    %849 = vmatprep.mubr.f32.mxu0 0.0
    %850 = vmatmul.mubr.f32.gmra.mrb[0].mxu0 %v778
    %v851 = vpop.f32.mrb[0].mxu0
    %v852 = vadd.f32 %v773, %v851
    %v853 = vpop.f32.mrb[0].mxu0
    %854 = vdwg.mxu0
    %v855 = vmax.f32 %v847, 0.0
    %v856 = vmax.f32 %v852, 0.0
    %v857 = vlaneseq
    %v858 = vshrl.u32 %v857, 7
    %v859 = vsub.s32 0, %v858
    %v860 = vrot.slane %v72, %v859
    %v862 = vsel %vm369, %v855, 0
    %v865 = vsel %vm369, %v856, 0
    %867 = vmatprep.subr.mxu0 0.0
    %868 = vmatpush1.msra.mxu0 %v50
    %869 = vmatprep.subr.mxu0 0.0
    %870 = vmatpush1.msra.mxu0 %v51
    %871 = vmatprep.subr.mxu0 0.0
    %872 = vmatpush1.msra.mxu0 %v52
    %873 = vmatprep.subr.mxu0 0.0
    %874 = vmatpush1.msra.mxu0 %v53
    %875 = vmatprep.subr.mxu0 0.0
    %876 = vmatpush1.msra.mxu0 %v54
    %877 = vmatprep.subr.mxu0 0.0
    %878 = vmatpush1.msra.mxu0 %v55
    %879 = vmatprep.subr.mxu0 0.0
    %880 = vmatpush1.msra.mxu0 %v56
    %881 = vmatprep.subr.mxu0 0.0
    %882 = vmatpush1.msra.mxu0 %v57
    %883 = vmatprep.subr.mxu0 0.0
    %884 = vmatpush1.msra.mxu0 0.0
    %885 = vmatprep.subr.mxu0 0.0
    %886 = vmatpush1.msra.mxu0 0.0
    %887 = vmatprep.subr.mxu0 0.0
    %888 = vmatpush1.msra.mxu0 0.0
    %889 = vmatprep.subr.mxu0 0.0
    %890 = vmatpush1.msra.mxu0 0.0
    %891 = vmatprep.subr.mxu0 0.0
    %892 = vmatpush1.msra.mxu0 0.0
    %893 = vmatprep.subr.mxu0 0.0
    %894 = vmatpush1.msra.mxu0 0.0
    %895 = vmatprep.subr.mxu0 0.0
    %896 = vmatpush1.msra.mxu0 0.0
    %897 = vmatprep.subr.mxu0 0.0
    %898 = vmatpush1.msra.mxu0 0.0
    %899 = vmatprep.subr.mxu0 0.0
    %900 = vmatpush1.msra.mxu0 0.0
    %901 = vmatprep.subr.mxu0 0.0
    %902 = vmatpush1.msra.mxu0 0.0
    %903 = vmatprep.subr.mxu0 0.0
    %904 = vmatpush1.msra.mxu0 0.0
    %905 = vmatprep.subr.mxu0 0.0
    %906 = vmatpush1.msra.mxu0 0.0
    %907 = vmatprep.subr.mxu0 0.0
    %908 = vmatpush1.msra.mxu0 0.0
    %909 = vmatprep.subr.mxu0 0.0
    %910 = vmatpush1.msra.mxu0 0.0
    %911 = vmatprep.subr.mxu0 0.0
    %912 = vmatpush1.msra.mxu0 0.0
    %913 = vmatprep.subr.mxu0 0.0
    %914 = vmatpush1.msra.mxu0 0.0
    %915 = vmatprep.subr.mxu0 0.0
    %916 = vmatpush1.msra.mxu0 0.0
    %917 = vmatprep.subr.mxu0 0.0
    %918 = vmatpush1.msra.mxu0 0.0
    %919 = vmatprep.subr.mxu0 0.0
    %920 = vmatpush1.msra.mxu0 0.0
    %921 = vmatprep.subr.mxu0 0.0
    %922 = vmatpush1.msra.mxu0 0.0
    %923 = vmatprep.subr.mxu0 0.0
    %924 = vmatpush1.msra.mxu0 0.0
    %925 = vmatprep.subr.mxu0 0.0
    %926 = vmatpush1.msra.mxu0 0.0
    %927 = vmatprep.subr.mxu0 0.0
    %928 = vmatpush1.msra.mxu0 0.0
    %929 = vmatprep.subr.mxu0 0.0
    %930 = vmatpush1.msra.mxu0 0.0
    %931 = vmatprep.mubr.f32.mxu0 0.0
    %932 = vmatmul.mubr.f32.gmra.mrb[0].mxu0 %v862
    %v933 = vpop.f32.mrb[0].mxu0
    %v934 = vadd.f32 %v860, %v933
    %v935 = vpop.f32.mrb[0].mxu0
    %936 = vmatprep.mubr.f32.mxu0 0.0
    %937 = vmatmul.mubr.f32.gmra.mrb[0].mxu0 %v865
    %v938 = vpop.f32.mrb[0].mxu0
    %v939 = vadd.f32 %v860, %v938
    %v940 = vpop.f32.mrb[0].mxu0
    %941 = vdwg.mxu0
    %v942 = vadd.f32 %v728, %v934
    %v943 = vadd.f32 %v729, %v939
    %944 = vst.msk [vmem:[#allocation7] sm:$0xff] %vm74, %v942
    %945 = vst.msk [vmem:[#allocation7 + $0x8] sm:$0xff] %vm74, %v943
    // Predicated region
    $region18: #{tpu_custom_call.1} parent=1 // pred_check
      _
    $region19: #{tpu_custom_call.1} parent=1 // pred_check_branch
      %947 = sbr.rel (0) target = $region21
    $region20: #{tpu_custom_call.1} parent=1 // pred_region
      %s949 = ssub.s32 256, 256
      %950 = vsyncadd [#allocation4], %s949
      %s951 = sshll.u32 [#allocation7], 4
      %s952 = int_to_ptr.vmem [resolvable:$true] %s951
      %957 = dma.vmem_to_hbm [thread:$0]  %s952, 256, %s2, [#allocation4], 128, 128, 8
    $region21: #{tpu_custom_call.1} parent=1 // pred_fallthru
      _
    // Predicated region
    $region22: #{tpu_custom_call.1} parent=1 // pred_check
      _
    $region23: #{tpu_custom_call.1} parent=1 // pred_check_branch
      %959 = sbr.rel (0) target = $region25
    $region24: #{tpu_custom_call.1} parent=1 // pred_region
      %960 = dma.done [#allocation4], 256
    $region25: #{tpu_custom_call.1} parent=1 // pred_fallthru
      _
    %961 = vsyncpa [#allocation3], 1
    %962 = vsyncpa [#allocation6], 1
    %963 = vsyncpa [#allocation4], 1

</llo_original>
